<compile_context>
chip_gen: v7x
topology: tpu7x:2x2x1
jax: 0.10.0
libtpu: 0.0.40
codegen_flags: <defaults>
</compile_context>

<pallas_src>
import jax
import jax.numpy as jnp
from jax.experimental import pallas as pl
from jax.experimental.pallas import tpu as pltpu


# ------------------------------ tiling helpers ------------------------------ #

def _round_up(x, m):
    return ((x + m - 1) // m) * m


def _pick_intermediate_tile(I, preferred):
    """Largest tile <= preferred dividing I, preferring 256/128 multiples."""
    for step in (256, 128, 8):
        t = (min(preferred, I) // step) * step
        while t >= step:
            if I % t == 0:
                return t
            t -= step
    return I


def _tpu_tile_prefs():
    """(tm_pref, ti_pref, vmem_limit_bytes) tuned per TPU generation."""
    kind = ""
    try:
        kind = jax.devices()[0].device_kind.lower()
    except Exception:
        pass
    if "v7" in kind:   # 64 MiB VMEM/TC, 3.2 TB/s HBM -> knee ~310 flops/byte
        return 512, 256, 56 * 1024 * 1024
    if "v6" in kind:   # 128 MiB VMEM, ~1.4 TB/s HBM -> knee ~700 flops/byte
        return 1024, 512, 104 * 1024 * 1024
    if "v5" in kind:   # 128x128 MXU, 0.82 TB/s HBM -> knee ~240 flops/byte
        return 256, 1024, 100 * 1024 * 1024
    return 512, 512, 64 * 1024 * 1024


def _shrink_tm_to_fit(tm, ti, H, vmem_limit_bytes):
    """Crude double-buffered VMEM footprint guard; keeps tm a 128 multiple."""
    def footprint(tm_):
        x_out = 2 * 2 * (tm_ * H * 2)                   # x + out, 2 bufs, bf16
        w = 2 * (H * 2 * ti * 2) + 2 * (ti * H * 2)     # gu + dw, 2 bufs, bf16
        acc = tm_ * H * 4                               # f32 scratch
        return x_out + w + acc
    while tm > 128 and footprint(tm) > 0.9 * vmem_limit_bytes:
        tm = max(128, (tm // 256) * 128)                # halve, stay 128-aligned
    return tm


# ------------------------------- Pallas kernel ------------------------------ #

def moe_group_ffn_kernel(x_ref, gu_ref, dw_ref, out_ref, acc_ref):
    """Grouped SwiGLU expert FFN with fused gate/up projection.

    Grid: (E, Cp // tm, I // ti)
      axis 0: expert             ("parallel")
      axis 1: token block        ("parallel")
      axis 2: intermediate chunk (reduction for down-proj, "arbitrary")

    Blocks:
      x_ref   : (1, tm, H)       bf16  dispatched tokens (reused over k)
      gu_ref  : (1, 1, H, 2*ti)  bf16  fused [gate | up] weight chunk k
      dw_ref  : (1, ti, H)       bf16  down_proj weight chunk k
      out_ref : (1, tm, H)       bf16  written once at the last chunk
      acc_ref : (tm, H)          f32   VMEM accumulator scratch
    """
    k = pl.program_id(2)
    ti = dw_ref.shape[1]

    x = x_ref[0]                                                        # (tm, H)
    gu = jnp.dot(x, gu_ref[0, 0], preferred_element_type=jnp.float32)   # (tm, 2*ti)
    gate = gu[:, :ti]
    up = gu[:, ti:]
    # SiLU + gating product in f32 on VPU/EUP, cast to bf16 for the MXU.
    h = (gate * jax.nn.sigmoid(gate) * up).astype(jnp.bfloat16)         # (tm, ti)
    contrib = jnp.dot(h, dw_ref[0], preferred_element_type=jnp.float32) # (tm, H)

    @pl.when(k == 0)
    def _init():                       # first chunk: write (no zero-init pass)
        acc_ref[...] = contrib

    @pl.when(k > 0)
    def _accum():
        acc_ref[...] += contrib

    @pl.when(k == pl.num_programs(2) - 1)
    def _flush():
        out_ref[0] = acc_ref[...].astype(out_ref.dtype)


# ------------------------------ parameter prep ------------------------------ #

def prepare_moe_params(params, ti_pref=None):
    """One-time weight re-layout: fuse gate/up into (E, nk, H, 2*ti) chunks."""
    E, H, I = params["gate_w"].shape
    if ti_pref is None:
        _, ti_pref, _ = _tpu_tile_prefs()
    ti = _pick_intermediate_tile(I, ti_pref)
    nk = I // ti
    g = params["gate_w"].reshape(E, H, nk, ti).transpose(0, 2, 1, 3)    # (E,nk,H,ti)
    u = params["up_w"].reshape(E, H, nk, ti).transpose(0, 2, 1, 3)
    gu_w = jnp.concatenate([g, u], axis=-1).astype(jnp.bfloat16)        # (E,nk,H,2ti)
    return {
        "router_w": params["router_w"],
        "gu_w": gu_w,
        "down_w": params["down_w"].astype(jnp.bfloat16),                # (E, I, H)
    }


# -------------------------------- JAX wrapper -------------------------------- #

def switch_moe_forward(hidden_states, prepped, capacity_factor=1.0,
                       router_aux_loss_coef=0.01, router_z_loss_coef=0.001,
                       tm_pref=None, vmem_limit_bytes=None):
    B, S, H = hidden_states.shape
    T = B * S
    gu_w = prepped["gu_w"]                       # (E, nk, H, 2*ti) bf16
    down_w = prepped["down_w"]                   # (E, I, H) bf16
    E, n_k, _, two_ti = gu_w.shape
    ti = two_ti // 2

    if tm_pref is None or vmem_limit_bytes is None:
        d_tm, _, d_vmem = _tpu_tile_prefs()
        tm_pref = tm_pref if tm_pref is not None else d_tm
        vmem_limit_bytes = vmem_limit_bytes if vmem_limit_bytes is not None else d_vmem

    x2d = hidden_states.reshape(T, H)

    # Router: tiny (T, E) matmul left to XLA (no extra f32 copy of activations).
    # argmax(softmax(logits)) == argmax(logits); the Switch top-1 routing weight
    # (softmax over the single gathered logit) is exactly 1.0.
    router_logits = jnp.dot(x2d, prepped["router_w"].astype(x2d.dtype),
                            preferred_element_type=jnp.float32)          # (T, E)
    selected_experts = jnp.argmax(router_logits, axis=-1)                 # (T,)

    # Capacity keep-mask + slot (position within expert), matching the PyTorch
    # in-order capacity counting. capacity is a trace-time constant.
    capacity = int(capacity_factor * T / E)
    onehot = jax.nn.one_hot(selected_experts, E, dtype=jnp.int32)          # (T, E)
    excl_count = jnp.cumsum(onehot, axis=0) - onehot
    pos_in_expert = jnp.sum(excl_count * onehot, axis=-1)                  # (T,)
    keep = pos_in_expert < capacity                                        # (T,)

    # MXU-aligned tiling: tm / Cp multiples of 128, capped per generation and
    # shrunk if the double-buffered footprint would not fit the VMEM limit.
    tm = min(tm_pref, _round_up(max(capacity, 1), 128))
    tm = _shrink_tm_to_fit(tm, ti, H, vmem_limit_bytes)
    Cp = _round_up(max(capacity, 1), tm)
    n_tb = Cp // tm

    # Dispatch: per-slot source-row indices via a tiny int32 scatter, then one
    # row GATHER of the activations (avoids the slow (E*Cp, H) XLA scatter and
    # the zero-filled buffer init).  Empty slots read the zero pad row.
    flat_slot = jnp.where(keep, selected_experts * Cp + pos_in_expert, E * Cp)
    src_idx = jnp.full((E * Cp,), T, dtype=jnp.int32).at[flat_slot].set(
        jnp.arange(T, dtype=jnp.int32), mode="drop")
    x_bf16 = x2d.astype(jnp.bfloat16)
    x_pad = jnp.concatenate([x_bf16, jnp.zeros((1, H), jnp.bfloat16)], axis=0)
    x_dispatch = jnp.take(x_pad, src_idx, axis=0).reshape(E, Cp, H)

    # --- grouped expert FFN (Pallas) ---
    y_dispatch = pl.pallas_call(
        moe_group_ffn_kernel,
        out_shape=jax.ShapeDtypeStruct((E, Cp, H), jnp.bfloat16),
        grid_spec=pltpu.PrefetchScalarGridSpec(
            num_scalar_prefetch=0,
            grid=(E, n_tb, n_k),
            in_specs=[
                pl.BlockSpec((1, tm, H), lambda e, i, k: (e, i, 0)),        # tokens
                pl.BlockSpec((1, 1, H, two_ti), lambda e, i, k: (e, k, 0, 0)),  # gate|up
                pl.BlockSpec((1, ti, H), lambda e, i, k: (e, k, 0)),        # down
            ],
            out_specs=pl.BlockSpec((1, tm, H), lambda e, i, k: (e, i, 0)),
            scratch_shapes=[pltpu.VMEM((tm, H), jnp.float32)],
        ),
        compiler_params=pltpu.CompilerParams(
            dimension_semantics=("parallel", "parallel", "arbitrary"),
            vmem_limit_bytes=vmem_limit_bytes,
        ),
    )(x_dispatch, gu_w, down_w)

    # Combine: masked gather kept in bf16 (top-1 routing weight == 1.0); single
    # cast to the input dtype at the end.
    gather_idx = jnp.where(keep, selected_experts * Cp + pos_in_expert, 0)
    y_flat = y_dispatch.reshape(E * Cp, H)
    out_flat = jnp.where(keep[:, None], jnp.take(y_flat, gather_idx, axis=0),
                         jnp.zeros((), y_flat.dtype))
    final_hidden_states = out_flat.astype(hidden_states.dtype).reshape(B, S, H)

    # Auxiliary losses (matches MoELayer._compute_aux_losses: unbiased var, z-loss).
    expert_usage = jnp.mean(onehot.astype(jnp.float32), axis=0)            # (E,)
    load_balancing_loss = E * jnp.var(expert_usage, ddof=1)                # torch.var unbiased
    aux_losses = {"load_balancing_loss": router_aux_loss_coef * load_balancing_loss}
    if router_z_loss_coef > 0:
        z = jax.scipy.special.logsumexp(router_logits, axis=-1)
        aux_losses["z_loss"] = router_z_loss_coef * jnp.mean(z ** 2)

    # TODO(synk): router_jitter_noise (training-only randn) and expert_dropout
    # (p=0.0, eval mode) are not implemented.
    return final_hidden_states, aux_losses, (router_logits, selected_experts, keep)


# -------------------- pure-JAX reference (matched precision) -------------------- #

def reference_forward(hidden_states, params, capacity_factor=1.0):
    B, S, H = hidden_states.shape
    T = B * S
    E = params["router_w"].shape[1]
    x2d = hidden_states.reshape(T, H)
    logits = jnp.dot(x2d, params["router_w"].astype(x2d.dtype),
                     preferred_element_type=jnp.float32)
    sel = jnp.argmax(logits, axis=-1)
    capacity = int(capacity_factor * T / E)
    onehot = jax.nn.one_hot(sel, E, dtype=jnp.float32)
    pos = jnp.cumsum(onehot, axis=0) - onehot
    keep = (jnp.sum(pos * onehot, axis=-1) < capacity).astype(jnp.float32)

    xb = x2d.astype(jnp.bfloat16)
    out = jnp.zeros((T, H), jnp.float32)
    for e in range(E):
        gw = params["gate_w"][e].astype(jnp.bfloat16)
        uw = params["up_w"][e].astype(jnp.bfloat16)
        dw = params["down_w"][e].astype(jnp.bfloat16)
        gate = jnp.dot(xb, gw, preferred_element_type=jnp.float32)
        up = jnp.dot(xb, uw, preferred_element_type=jnp.float32)
        h = (gate * jax.nn.sigmoid(gate) * up).astype(jnp.bfloat16)
        y = jnp.dot(h, dw, preferred_element_type=jnp.float32)
        y = y.astype(jnp.bfloat16).astype(jnp.float32)   # match kernel output dtype
        w = onehot[:, e] * keep
        out = out + y * w[:, None]
    return out.reshape(B, S, H).astype(hidden_states.dtype)


# ----------------------------------- main ----------------------------------- #

if __name__ == "__main__":
    # Small synthetic config: B=2, S=8, hidden=32, intermediate=64, 4 experts.
    B, S, H, I, E = 2, 8, 32, 64, 4
    key = jax.random.PRNGKey(0)
    k_x, k_r, k_g, k_u, k_d = jax.random.split(key, 5)

    hidden_states = jax.random.normal(k_x, (B, S, H), dtype=jnp.float32)
    params = {
        "router_w": 0.05 * jax.random.normal(k_r, (H, E), dtype=jnp.float32),
        "gate_w": 0.05 * jax.random.normal(k_g, (E, H, I), dtype=jnp.float32),
        "up_w": 0.05 * jax.random.normal(k_u, (E, H, I), dtype=jnp.float32),
        "down_w": 0.05 * jax.random.normal(k_d, (E, I, H), dtype=jnp.float32),
    }

    prepped = prepare_moe_params(params)
    fwd = jax.jit(switch_moe_forward)
    out, aux, _ = fwd(hidden_states, prepped)
    out = jax.block_until_ready(out)
    aux = {k: jax.block_until_ready(v) for k, v in aux.items()}

    ref = reference_forward(hidden_states, params, capacity_factor=1.0)
    assert out.shape == (B, S, H)
    assert jnp.allclose(out, ref, atol=5e-3, rtol=5e-3), "mismatch vs reference"
    assert jnp.isfinite(aux["load_balancing_loss"]) and jnp.isfinite(aux["z_loss"])

    print("KERNEL_OK")
</pallas_src>

<mosaic_0001>
module attributes {stable_mosaic.version = 11 : i64} {
  func.func @moe_group_ffn_kernel(%arg0: i32, %arg1: i32, %arg2: i32, %arg3: memref<1x128x32xbf16, #tpu.memory_space<vmem>>, %arg4: memref<1x1x32x128xbf16, #tpu.memory_space<vmem>>, %arg5: memref<1x64x32xbf16, #tpu.memory_space<vmem>>, %arg6: memref<1x128x32xbf16, #tpu.memory_space<vmem>>, %arg7: memref<128x32xf32, #tpu.memory_space<vmem>>) attributes {dimension_semantics = [#tpu.dimension_semantics<parallel>, #tpu.dimension_semantics<parallel>, #tpu.dimension_semantics<arbitrary>], iteration_bounds = array<i64: 4, 1, 1>, scalar_prefetch = 0 : i64, scratch_operands = 1 : i64, tpu.core_type = #tpu.core_type<tc>, window_params = [{transform_indices = @transform_0, window_bounds = array<i64: 1, 128, 32>}, {transform_indices = @transform_1, window_bounds = array<i64: 1, 1, 32, 128>}, {transform_indices = @transform_2, window_bounds = array<i64: 1, 64, 32>}, {transform_indices = @transform_3, window_bounds = array<i64: 1, 128, 32>}]} {
    %c0 = arith.constant 0 : index
    %c0_0 = arith.constant 0 : index
    %c0_1 = arith.constant 0 : index
    %0 = vector.load %arg3[%c0, %c0_0, %c0_1] : memref<1x128x32xbf16, #tpu.memory_space<vmem>>, vector<1x128x32xbf16>
    %1 = vector.shape_cast %0 : vector<1x128x32xbf16> to vector<128x32xbf16>
    %c0_2 = arith.constant 0 : index
    %c0_3 = arith.constant 0 : index
    %c0_4 = arith.constant 0 : index
    %c0_5 = arith.constant 0 : index
    %2 = vector.load %arg4[%c0_2, %c0_3, %c0_4, %c0_5] : memref<1x1x32x128xbf16, #tpu.memory_space<vmem>>, vector<1x1x32x128xbf16>
    %3 = vector.shape_cast %2 : vector<1x1x32x128xbf16> to vector<32x128xbf16>
    %cst = arith.constant dense<0.000000e+00> : vector<128x128xf32>
    %4 = tpu.matmul %1, %3, %cst {dimension_numbers = #tpu.dot_dimension_numbers<[1], [0], [0], [1], [0, 0, 1, 1], [], []>} : vector<128x32xbf16>, vector<32x128xbf16>, vector<128x128xf32> -> vector<128x128xf32>
    %5 = vector.extract_strided_slice %4 {offsets = [0, 0], sizes = [128, 64], strides = [1, 1]} : vector<128x128xf32> to vector<128x64xf32>
    %6 = vector.extract_strided_slice %4 {offsets = [0, 64], sizes = [128, 64], strides = [1, 1]} : vector<128x128xf32> to vector<128x64xf32>
    %7 = arith.negf %5 : vector<128x64xf32>
    %8 = math.exp %7 : vector<128x64xf32>
    %cst_6 = arith.constant 1.000000e+00 : f32
    %9 = vector.broadcast %cst_6 : f32 to vector<128x64xf32>
    %10 = arith.addf %9, %8 : vector<128x64xf32>
    %11 = arith.divf %9, %10 : vector<128x64xf32>
    %12 = arith.mulf %5, %11 : vector<128x64xf32>
    %13 = arith.mulf %12, %6 : vector<128x64xf32>
    %14 = arith.truncf %13 : vector<128x64xf32> to vector<128x64xbf16>
    %c0_7 = arith.constant 0 : index
    %c0_8 = arith.constant 0 : index
    %c0_9 = arith.constant 0 : index
    %15 = vector.load %arg5[%c0_7, %c0_8, %c0_9] : memref<1x64x32xbf16, #tpu.memory_space<vmem>>, vector<1x64x32xbf16>
    %16 = vector.shape_cast %15 : vector<1x64x32xbf16> to vector<64x32xbf16>
    %cst_10 = arith.constant dense<0.000000e+00> : vector<128x32xf32>
    %17 = tpu.matmul %14, %16, %cst_10 {dimension_numbers = #tpu.dot_dimension_numbers<[1], [0], [0], [1], [0, 0, 1, 1], [], []>} : vector<128x64xbf16>, vector<64x32xbf16>, vector<128x32xf32> -> vector<128x32xf32>
    %c0_i32 = arith.constant 0 : i32
    %18 = arith.cmpi eq, %arg2, %c0_i32 : i32
    %19 = arith.extui %18 : i1 to i32
    %c0_i32_11 = arith.constant 0 : i32
    %20 = arith.cmpi ne, %19, %c0_i32_11 : i32
    scf.if %20 {
      %c0_16 = arith.constant 0 : index
      %c0_17 = arith.constant 0 : index
      %27 = vector.load %arg7[%c0_16, %c0_17] : memref<128x32xf32, #tpu.memory_space<vmem>>, vector<128x32xf32>
      tpu.vector_store %arg7[%c0_16, %c0_17], %17 {strides = array<i32>} : memref<128x32xf32, #tpu.memory_space<vmem>>, vector<128x32xf32>,
    } else {
    }
    %c0_i32_12 = arith.constant 0 : i32
    %21 = arith.cmpi sgt, %arg2, %c0_i32_12 : i32
    %22 = arith.extui %21 : i1 to i32
    %c0_i32_13 = arith.constant 0 : i32
    %23 = arith.cmpi ne, %22, %c0_i32_13 : i32
    scf.if %23 {
      %c0_16 = arith.constant 0 : index
      %c0_17 = arith.constant 0 : index
      %27 = vector.load %arg7[%c0_16, %c0_17] : memref<128x32xf32, #tpu.memory_space<vmem>>, vector<128x32xf32>
      %28 = arith.addf %27, %17 : vector<128x32xf32>
      %c0_18 = arith.constant 0 : index
      %c0_19 = arith.constant 0 : index
      %29 = vector.load %arg7[%c0_18, %c0_19] : memref<128x32xf32, #tpu.memory_space<vmem>>, vector<128x32xf32>
      tpu.vector_store %arg7[%c0_18, %c0_19], %28 {strides = array<i32>} : memref<128x32xf32, #tpu.memory_space<vmem>>, vector<128x32xf32>,
    } else {
    }
    %c0_i32_14 = arith.constant 0 : i32
    %24 = arith.cmpi eq, %arg2, %c0_i32_14 : i32
    %25 = arith.extui %24 : i1 to i32
    %c0_i32_15 = arith.constant 0 : i32
    %26 = arith.cmpi ne, %25, %c0_i32_15 : i32
    scf.if %26 {
      %c0_16 = arith.constant 0 : index
      %c0_17 = arith.constant 0 : index
      %27 = vector.load %arg7[%c0_16, %c0_17] : memref<128x32xf32, #tpu.memory_space<vmem>>, vector<128x32xf32>
      %28 = arith.truncf %27 : vector<128x32xf32> to vector<128x32xbf16>
      %c0_18 = arith.constant 0 : index
      %c0_19 = arith.constant 0 : index
      %c0_20 = arith.constant 0 : index
      %29 = vector.load %arg6[%c0_18, %c0_19, %c0_20] : memref<1x128x32xbf16, #tpu.memory_space<vmem>>, vector<1x128x32xbf16>
      %30 = vector.shape_cast %29 : vector<1x128x32xbf16> to vector<128x32xbf16>
      %31 = vector.shape_cast %28 : vector<128x32xbf16> to vector<1x128x32xbf16>
      tpu.vector_store %arg6[%c0_18, %c0_19, %c0_20], %31 {strides = array<i32>} : memref<1x128x32xbf16, #tpu.memory_space<vmem>>, vector<1x128x32xbf16>,
    } else {
    }
    return
  }
  func.func @transform_0(%arg0: i32, %arg1: i32, %arg2: i32) -> (i32, i32, i32) {
    %c0_i32 = arith.constant 0 : i32
    %c0_i32_0 = arith.constant 0 : i32
    return %arg0, %arg1, %c0_i32 : i32, i32, i32
  }
  func.func @transform_1(%arg0: i32, %arg1: i32, %arg2: i32) -> (i32, i32, i32, i32) {
    %c0_i32 = arith.constant 0 : i32
    %c0_i32_0 = arith.constant 0 : i32
    %c0_i32_1 = arith.constant 0 : i32
    return %arg0, %arg2, %c0_i32, %c0_i32_0 : i32, i32, i32, i32
  }
  func.func @transform_2(%arg0: i32, %arg1: i32, %arg2: i32) -> (i32, i32, i32) {
    %c0_i32 = arith.constant 0 : i32
    %c0_i32_0 = arith.constant 0 : i32
    return %arg0, %arg2, %c0_i32 : i32, i32, i32
  }
  func.func @transform_3(%arg0: i32, %arg1: i32, %arg2: i32) -> (i32, i32, i32) {
    %c0_i32 = arith.constant 0 : i32
    %c0_i32_0 = arith.constant 0 : i32
    return %arg0, %arg1, %c0_i32 : i32, i32, i32
  }
}

</mosaic_0001>

<llo_original>
// kernel: switch_moe_forward.1
$region0: #{switch_moe_forward.1}
  #allocation0 [shape = 'u32[]', space=smem, size = 0x4, offset = 0x4, fixed_abs, tag = 'smem constant byte address 0x4 - core index']
  #allocation1 [shape = 'u32[144,128]{1,0:T(1,128)}', space=vmem, size = 0x12000, scoped, tag = 'internal scratch']
  #allocation2 [shape = 'f32[128,32]{1,0:T(8,128)}', space=vmem, size = 0x10000, scoped, tag = 'scratch operand']
  %s0 = inlined_call_operand.hbm [shape: bf16[4,128,32], index: 0, kind: input, shape index: {}]
  %s1 = inlined_call_operand.hbm [shape: bf16[4,1,32,128], index: 1, kind: input, shape index: {}]
  %s2 = inlined_call_operand.hbm [shape: bf16[4,64,32], index: 2, kind: input, shape index: {}]
  %s3 = inlined_call_operand.hbm [shape: bf16[4,128,32], index: 3, kind: output, shape index: {}]
  %s4 = sld [smem:[#allocation0]]
  $region69: #{switch_moe_forward.1} parent=0
    _
  %s6 = ssub.s32 1, %s4
  %s7 = scalar_select 0, %s6, %s4
  $region1: #{switch_moe_forward.1} parent=0
    #allocation3 [shape = 'u8[65536]{0}', space=vmem, size = 0x10000, scoped, tag = 'input window, operand 0']
    #allocation4 [shape = 's32[2]{0}', space=sflag, size = 0x8, scoped, tag = 'scoped memory for switch_moe_forward.1']
    #allocation5 [shape = 's32[2]{0}', space=sflag, size = 0x8, scoped, tag = 'scoped memory for switch_moe_forward.1']
    #allocation6 [shape = 'u8[16384]{0}', space=vmem, size = 0x4000, scoped, tag = 'input window, operand 1']
    #allocation7 [shape = 's32[2]{0}', space=sflag, size = 0x8, scoped, tag = 'scoped memory for switch_moe_forward.1']
    #allocation8 [shape = 'u8[32768]{0}', space=vmem, size = 0x8000, scoped, tag = 'input window, operand 2']
    #allocation9 [shape = 'u8[65536]{0}', space=vmem, size = 0x10000, scoped, tag = 'output window, operand 0']
    %8 = vsyncpa [#allocation4], 0
    %s9 = scalar_lea.sflag [#allocation4], 1
    %10 = vsyncpa %s9, 0
    %11 = vsyncpa [#allocation7], 0
    %s12 = scalar_lea.sflag [#allocation7], 1
    %13 = vsyncpa %s12, 0
    %14 = vsyncpa [#allocation5], 0
    %s15 = scalar_lea.sflag [#allocation5], 1
    %16 = vsyncpa %s15, 0
    loop: start=0, step=1, limit=6
    $region2: #{switch_moe_forward.1} parent=1 // loop_pre_header
      _
    $region3: #{switch_moe_forward.1} parent=1 // loop_header
      %s18 = sphi 0, %s22
      %p19 = scmp.ge.s32.totalorder %s18, 6
      %s25 = sphi 0, %s44
      %s26 = sphi 0, %s40
      %s27 = sphi 0, %s36
      %s28 = sphi 0, %s25
      %s29 = sphi 0, %s26
      %s30 = sphi 0, %s27
      %s31 = sphi 0, %s28
      %s32 = sphi 0, %s29
      %s33 = sphi 0, %s30
      %s49 = sphi 0, %s51
      %s52 = sphi 0, %s49
      %s53 = sphi 0, %s52
      %s69 = sphi 0, %s53
      %s77 = sphi 0, %s79
      %s80 = sphi 0, %s77
      %s81 = sphi 0, %s80
      %s97 = sphi 0, %s81
      %s105 = sphi 0, %s107
      %s108 = sphi 0, %s105
      %s109 = sphi 0, %s108
      %s125 = sphi 0, %s109
      %s133 = sphi 0, %s135
      %s136 = sphi 0, %s133
      %s137 = sphi 0, %s136
      %s153 = sphi 0, %s137
    $region4: #{switch_moe_forward.1} parent=1 // loop_header_branch
      %21 = sbr.rel (%p19) target = $region8
    $region5: #{switch_moe_forward.1} parent=1 // loop_body
      %s23 = ssub.s32 %s18, 1
      %s24 = ssub.s32 %s18, 2
      %s34 = sadd.s32 1, %s27
      %p35 = scmp.ge.s32.totalorder %s34, 1
      %s36 = scalar_select %p35, 0, %s34
      %s37 = sadd.s32 1, %s26
      %s38 = scalar_select %p35, %s37, %s26
      %p39 = scmp.ge.s32.totalorder %s38, 1
      %s40 = scalar_select %p39, 0, %s38
      %s41 = sadd.s32 1, %s25
      %s42 = scalar_select %p39, %s41, %s25
      %p43 = scmp.ge.s32.totalorder %s42, 4
      %s44 = scalar_select %p43, 0, %s42
      %s45 = ssub.s32 %s25, %s44
      %s46 = ssub.s32 %s26, %s40
      %s47 = sor.u32 %s45, %s46
      %p48 = scmp.eq.s32.totalorder %s47, 0
      %s50 = sadd.s32 %s49, 1
      %s51 = scalar_select %p48, %s49, %s50
      %p54 = pneg %p48
      %p55 = scmp.eq.s32.totalorder %s18, 3
      %p56 = por %p54, %p55
      %p57 = scmp.ne.s32.totalorder %s49, %s52
      %p58 = scmp.eq.s32.totalorder %s18, 0
      %p59 = por %p57, %p58
      %p60 = scmp.ne.s32.totalorder %s49, %s52
      %p61 = scmp.eq.s32.totalorder %s23, 3
      %p62 = por %p60, %p61
      %p63 = scmp.ne.s32.totalorder %s52, %s53
      %p64 = scmp.eq.s32.totalorder %s23, 0
      %p65 = por %p63, %p64
      %p66 = scmp.ne.s32.totalorder %s52, %s53
      %p67 = scmp.eq.s32.totalorder %s24, 3
      %p68 = por %p66, %p67
      %p70 = scmp.ne.s32.totalorder %s53, %s69
      %p71 = scmp.eq.s32.totalorder %s24, 0
      %p72 = por %p70, %p71
      %s73 = ssub.s32 %s25, %s44
      %s74 = ssub.s32 %s27, %s36
      %s75 = sor.u32 %s73, %s74
      %p76 = scmp.eq.s32.totalorder %s75, 0
      %s78 = sadd.s32 %s77, 1
      %s79 = scalar_select %p76, %s77, %s78
      %p82 = pneg %p76
      %p83 = scmp.eq.s32.totalorder %s18, 3
      %p84 = por %p82, %p83
      %p85 = scmp.ne.s32.totalorder %s77, %s80
      %p86 = scmp.eq.s32.totalorder %s18, 0
      %p87 = por %p85, %p86
      %p88 = scmp.ne.s32.totalorder %s77, %s80
      %p89 = scmp.eq.s32.totalorder %s23, 3
      %p90 = por %p88, %p89
      %p91 = scmp.ne.s32.totalorder %s80, %s81
      %p92 = scmp.eq.s32.totalorder %s23, 0
      %p93 = por %p91, %p92
      %p94 = scmp.ne.s32.totalorder %s80, %s81
      %p95 = scmp.eq.s32.totalorder %s24, 3
      %p96 = por %p94, %p95
      %p98 = scmp.ne.s32.totalorder %s81, %s97
      %p99 = scmp.eq.s32.totalorder %s24, 0
      %p100 = por %p98, %p99
      %s101 = ssub.s32 %s25, %s44
      %s102 = ssub.s32 %s27, %s36
      %s103 = sor.u32 %s101, %s102
      %p104 = scmp.eq.s32.totalorder %s103, 0
      %s106 = sadd.s32 %s105, 1
      %s107 = scalar_select %p104, %s105, %s106
      %p110 = pneg %p104
      %p111 = scmp.eq.s32.totalorder %s18, 3
      %p112 = por %p110, %p111
      %p113 = scmp.ne.s32.totalorder %s105, %s108
      %p114 = scmp.eq.s32.totalorder %s18, 0
      %p115 = por %p113, %p114
      %p116 = scmp.ne.s32.totalorder %s105, %s108
      %p117 = scmp.eq.s32.totalorder %s23, 3
      %p118 = por %p116, %p117
      %p119 = scmp.ne.s32.totalorder %s108, %s109
      %p120 = scmp.eq.s32.totalorder %s23, 0
      %p121 = por %p119, %p120
      %p122 = scmp.ne.s32.totalorder %s108, %s109
      %p123 = scmp.eq.s32.totalorder %s24, 3
      %p124 = por %p122, %p123
      %p126 = scmp.ne.s32.totalorder %s109, %s125
      %p127 = scmp.eq.s32.totalorder %s24, 0
      %p128 = por %p126, %p127
      %s129 = ssub.s32 %s25, %s44
      %s130 = ssub.s32 %s26, %s40
      %s131 = sor.u32 %s129, %s130
      %p132 = scmp.eq.s32.totalorder %s131, 0
      %s134 = sadd.s32 %s133, 1
      %s135 = scalar_select %p132, %s133, %s134
      %p138 = pneg %p132
      %p139 = scmp.eq.s32.totalorder %s18, 3
      %p140 = por %p138, %p139
      %p141 = scmp.ne.s32.totalorder %s133, %s136
      %p142 = scmp.eq.s32.totalorder %s18, 0
      %p143 = por %p141, %p142
      %p144 = scmp.ne.s32.totalorder %s133, %s136
      %p145 = scmp.eq.s32.totalorder %s23, 3
      %p146 = por %p144, %p145
      %p147 = scmp.ne.s32.totalorder %s136, %s137
      %p148 = scmp.eq.s32.totalorder %s23, 0
      %p149 = por %p147, %p148
      %p150 = scmp.ne.s32.totalorder %s136, %s137
      %p151 = scmp.eq.s32.totalorder %s24, 3
      %p152 = por %p150, %p151
      %p154 = scmp.ne.s32.totalorder %s137, %s153
      %p155 = scmp.eq.s32.totalorder %s24, 0
      %p156 = por %p154, %p155
      %p157 = scmp.le.s32.totalorder 1, %s18
      %p158 = scmp.lt.s32.totalorder %s18, 5
      %p159 = pnand %p157, %p158
      %p160 = pneg %p159
      // Predicated region
      $region9: #{switch_moe_forward.1} parent=5 // pred_check
        _
      $region10: #{switch_moe_forward.1} parent=5 // pred_check_branch
        %162 = sbr.rel (%p159) target = $region12
      $region11: #{switch_moe_forward.1} parent=5 // pred_region
        %s163 = ssub.s32 %s18, 1
      $region12: #{switch_moe_forward.1} parent=5 // pred_fallthru
        _
      %p164 = scmp.lt.s32.totalorder %s18, 4
      // Predicated region
      $region13: #{switch_moe_forward.1} parent=5 // pred_check
        %p165 = pneg %p164
      $region14: #{switch_moe_forward.1} parent=5 // pred_check_branch
        %167 = sbr.rel (%p165) target = $region16
      $region15: #{switch_moe_forward.1} parent=5 // pred_region
        // Predicated region
        $region17: #{switch_moe_forward.1} parent=15 // pred_check
          %p168 = pneg %p59
        $region18: #{switch_moe_forward.1} parent=15 // pred_check_branch
          %170 = sbr.rel (%p168) target = $region20
        $region19: #{switch_moe_forward.1} parent=15 // pred_region
          %s171 = sand.u32 %s49, 1
          %s172 = scalar_lea.sflag [#allocation4], %s171
          %s173 = sand.u32 %s49, 1
          %s174 = smul.addr %s173, 64
          %s175 = scalar_lea.vmem [#allocation3], %s174
          %s176 = smul.u32 16, %s26
          %s178 = ssub.s32 1024, 1024
          %179 = vsyncadd %s172, %s178
          %s180 = smul.addr %s25, 16
          %s181 = sadd.s32 %s176, %s180
          %s182 = smul.addr %s181, 64
          %s183 = scalar_lea.hbm %s0, %s182
          %s184 = sshll.u32 %s175, 4
          %s185 = int_to_ptr.vmem [resolvable:$true] %s184
          %190 = dma.hbm_to_vmem [thread:$0]  %s183, 1024, %s185, %s172, 64, 64, 4
        $region20: #{switch_moe_forward.1} parent=15 // pred_fallthru
          _
        // Predicated region
        $region21: #{switch_moe_forward.1} parent=15 // pred_check
          %p191 = pneg %p87
        $region22: #{switch_moe_forward.1} parent=15 // pred_check_branch
          %193 = sbr.rel (%p191) target = $region24
        $region23: #{switch_moe_forward.1} parent=15 // pred_region
          %s194 = sand.u32 %s18, 1
          %s195 = scalar_lea.sflag [#allocation7], %s194
          %s196 = sand.u32 %s77, 1
          %s197 = smul.addr %s196, 16
          %s198 = scalar_lea.vmem [#allocation6], %s197
          %s200 = ssub.s32 256, 256
          %201 = vsyncadd %s195, %s200
          %s202 = smul.addr %s27, 4
          %s203 = smul.addr %s25, 4
          %s204 = sadd.s32 %s202, %s203
          %s205 = smul.addr %s204, 64
          %s206 = scalar_lea.hbm %s1, %s205
          %s207 = sshll.u32 %s198, 4
          %s208 = int_to_ptr.vmem [resolvable:$true] %s207
          %213 = dma.hbm_to_vmem [thread:$0]  %s206, 256, %s208, %s195, 64, 64, 4
        $region24: #{switch_moe_forward.1} parent=15 // pred_fallthru
          _
        // Predicated region
        $region25: #{switch_moe_forward.1} parent=15 // pred_check
          %p214 = pneg %p115
        $region26: #{switch_moe_forward.1} parent=15 // pred_check_branch
          %216 = sbr.rel (%p214) target = $region28
        $region27: #{switch_moe_forward.1} parent=15 // pred_region
          %s217 = sand.u32 %s18, 1
          %s218 = scalar_lea.sflag [#allocation7], %s217
          %s219 = sand.u32 %s105, 1
          %s220 = smul.addr %s219, 32
          %s221 = scalar_lea.vmem [#allocation8], %s220
          %s222 = smul.u32 8, %s27
          %s224 = ssub.s32 512, 512
          %225 = vsyncadd %s218, %s224
          %s226 = smul.addr %s25, 8
          %s227 = sadd.s32 %s222, %s226
          %s228 = smul.addr %s227, 64
          %s229 = scalar_lea.hbm %s2, %s228
          %s230 = sshll.u32 %s221, 4
          %s231 = int_to_ptr.vmem [resolvable:$true] %s230
          %236 = dma.hbm_to_vmem [thread:$0]  %s229, 512, %s231, %s218, 64, 64, 4
        $region28: #{switch_moe_forward.1} parent=15 // pred_fallthru
          _
      $region16: #{switch_moe_forward.1} parent=5 // pred_fallthru
        _
      %p237 = scmp.le.s32.totalorder 1, %s18
      %p238 = scmp.lt.s32.totalorder %s18, 5
      %p239 = pnand %p237, %p238
      %p240 = pneg %p239
      // Predicated region
      $region29: #{switch_moe_forward.1} parent=5 // pred_check
        _
      $region30: #{switch_moe_forward.1} parent=5 // pred_check_branch
        %242 = sbr.rel (%p239) target = $region32
      $region31: #{switch_moe_forward.1} parent=5 // pred_region
        %s243 = ssub.s32 %s18, 1
        %s244 = sand.u32 %s52, 1
        %s245 = scalar_lea.sflag [#allocation4], %s244
        %s246 = sand.u32 %s52, 1
        %s247 = smul.addr %s246, 64
        %s248 = scalar_lea.vmem [#allocation3], %s247
        // Predicated region
        $region33: #{switch_moe_forward.1} parent=31 // pred_check
          %p249 = pneg %p65
        $region34: #{switch_moe_forward.1} parent=31 // pred_check_branch
          %251 = sbr.rel (%p249) target = $region36
        $region35: #{switch_moe_forward.1} parent=31 // pred_region
          %252 = dma.done %s245, 1024
        $region36: #{switch_moe_forward.1} parent=31 // pred_fallthru
          _
        %s253 = sand.u32 %s23, 1
        %s254 = scalar_lea.sflag [#allocation7], %s253
        %s255 = sand.u32 %s80, 1
        %s256 = smul.addr %s255, 16
        %s257 = scalar_lea.vmem [#allocation6], %s256
        // Predicated region
        $region37: #{switch_moe_forward.1} parent=31 // pred_check
          %p258 = pneg %p93
        $region38: #{switch_moe_forward.1} parent=31 // pred_check_branch
          %260 = sbr.rel (%p258) target = $region40
        $region39: #{switch_moe_forward.1} parent=31 // pred_region
          %261 = dma.done %s254, 256
        $region40: #{switch_moe_forward.1} parent=31 // pred_fallthru
          _
        %s262 = sand.u32 %s23, 1
        %s263 = scalar_lea.sflag [#allocation7], %s262
        %s264 = sand.u32 %s108, 1
        %s265 = smul.addr %s264, 32
        %s266 = scalar_lea.vmem [#allocation8], %s265
        // Predicated region
        $region41: #{switch_moe_forward.1} parent=31 // pred_check
          %p267 = pneg %p121
        $region42: #{switch_moe_forward.1} parent=31 // pred_check_branch
          %269 = sbr.rel (%p267) target = $region44
        $region43: #{switch_moe_forward.1} parent=31 // pred_region
          %270 = dma.done %s263, 512
        $region44: #{switch_moe_forward.1} parent=31 // pred_fallthru
          _
        %s271 = sand.u32 %s52, 1
        %s272 = scalar_lea.sflag [#allocation4], %s271
        %s273 = sand.u32 %s52, 1
        %s274 = smul.addr %s273, 64
        %s275 = scalar_lea.vmem [#allocation3], %s274
        %p276 = pneg %p65
        %p277 = pneg %p62
        %s278 = sand.u32 %s23, 1
        %s279 = scalar_lea.sflag [#allocation7], %s278
        %s280 = sand.u32 %s80, 1
        %s281 = smul.addr %s280, 16
        %s282 = scalar_lea.vmem [#allocation6], %s281
        %p283 = pneg %p93
        %p284 = pneg %p90
        %s285 = sand.u32 %s23, 1
        %s286 = scalar_lea.sflag [#allocation7], %s285
        %s287 = sand.u32 %s108, 1
        %s288 = smul.addr %s287, 32
        %s289 = scalar_lea.vmem [#allocation8], %s288
        %p290 = pneg %p121
        %p291 = pneg %p118
        %p292 = pneg %p149
        %p293 = pneg %p146
        %s294 = sand.u32 %s136, 1
        %s295 = scalar_lea.sflag [#allocation5], %s294
        %s296 = sand.u32 %s136, 1
        %s297 = smul.addr %s296, 64
        %s298 = scalar_lea.vmem [#allocation9], %s297
        %s299 = smul.u32 16, %s29
        %s300 = smul.u32 8, %s30
        %s301 = smul.u32 16, %s29
        %v303 = vld [vmem:[%s248] sm:$0xf]
        %v304 = vld [vmem:[%s248 + $0x4] sm:$0xf]
        %v305 = vld [vmem:[%s248 + $0x8] sm:$0xf]
        %v306 = vld [vmem:[%s248 + $0xc] sm:$0xf]
        %v307 = vld [vmem:[%s248 + $0x10] sm:$0xf]
        %v308 = vld [vmem:[%s248 + $0x14] sm:$0xf]
        %v309 = vld [vmem:[%s248 + $0x18] sm:$0xf]
        %v310 = vld [vmem:[%s248 + $0x1c] sm:$0xf]
        %v311 = vld [vmem:[%s248 + $0x20] sm:$0xf]
        %v312 = vld [vmem:[%s248 + $0x24] sm:$0xf]
        %v313 = vld [vmem:[%s248 + $0x28] sm:$0xf]
        %v314 = vld [vmem:[%s248 + $0x2c] sm:$0xf]
        %v315 = vld [vmem:[%s248 + $0x30] sm:$0xf]
        %v316 = vld [vmem:[%s248 + $0x34] sm:$0xf]
        %v317 = vld [vmem:[%s248 + $0x38] sm:$0xf]
        %v318 = vld [vmem:[%s248 + $0x3c] sm:$0xf]
        %v319 = vld [vmem:[%s257] sm:$0xf]
        %v320 = vld [vmem:[%s257 + $0x4] sm:$0xf]
        %v321 = vld [vmem:[%s257 + $0x8] sm:$0xf]
        %v322 = vld [vmem:[%s257 + $0xc] sm:$0xf]
        %v339 = vunpack.c.l.b16 %v303
        %v340 = vunpack.c.l.b16 %v304
        %v341 = vunpack.c.l.b16 %v305
        %v342 = vunpack.c.l.b16 %v306
        %v343 = vunpack.c.l.b16 %v307
        %v344 = vunpack.c.l.b16 %v308
        %v345 = vunpack.c.l.b16 %v309
        %v346 = vunpack.c.l.b16 %v310
        %v347 = vunpack.c.l.b16 %v311
        %v348 = vunpack.c.l.b16 %v312
        %v349 = vunpack.c.l.b16 %v313
        %v350 = vunpack.c.l.b16 %v314
        %v351 = vunpack.c.l.b16 %v315
        %v352 = vunpack.c.l.b16 %v316
        %v353 = vunpack.c.l.b16 %v317
        %v354 = vunpack.c.l.b16 %v318
        %v355 = vpack.c.b16 %v340, %v339
        %v356 = vpack.c.b16 %v342, %v341
        %v357 = vpack.c.b16 %v344, %v343
        %v358 = vpack.c.b16 %v346, %v345
        %v359 = vpack.c.b16 %v348, %v347
        %v360 = vpack.c.b16 %v350, %v349
        %v361 = vpack.c.b16 %v352, %v351
        %v362 = vpack.c.b16 %v354, %v353
        %v367 = vunpack.c.l.b16 %v319
        %v368 = vunpack.c.l.b16 %v320
        %v369 = vunpack.c.l.b16 %v321
        %v370 = vunpack.c.l.b16 %v322
        %v371 = vpack.c.b16 %v368, %v367
        %v372 = vpack.c.b16 %v370, %v369
        %vm375 = vcmask 261120
        %v377 = vsel %vm375, %v355, 0
        %v380 = vsel %vm375, %v356, 0
        %v383 = vsel %vm375, %v357, 0
        %v386 = vsel %vm375, %v358, 0
        %v389 = vsel %vm375, %v359, 0
        %v392 = vsel %vm375, %v360, 0
        %v395 = vsel %vm375, %v361, 0
        %v398 = vsel %vm375, %v362, 0
        %400 = vmatprep.subr.bf16.mxu0 0
        %401 = vmatpush1.bf16.msra.mxu0 %v371
        %402 = vmatprep.subr.bf16.mxu0 0
        %403 = vmatpush1.bf16.msra.mxu0 %v372
        %404 = vmatprep.subr.bf16.mxu0 0
        %405 = vmatpush1.bf16.msra.mxu0 0
        %406 = vmatprep.subr.bf16.mxu0 0
        %407 = vmatpush1.bf16.msra.mxu0 0
        %408 = vmatprep.subr.bf16.mxu0 0
        %409 = vmatpush1.bf16.msra.mxu0 0
        %410 = vmatprep.subr.bf16.mxu0 0
        %411 = vmatpush1.bf16.msra.mxu0 0
        %412 = vmatprep.subr.bf16.mxu0 0
        %413 = vmatpush1.bf16.msra.mxu0 0
        %414 = vmatprep.subr.bf16.mxu0 0
        %415 = vmatpush1.bf16.msra.mxu0 0
        %416 = vmatprep.subr.bf16.mxu0 0
        %417 = vmatpush1.bf16.msra.mxu0 0
        %418 = vmatprep.subr.bf16.mxu0 0
        %419 = vmatpush1.bf16.msra.mxu0 0
        %420 = vmatprep.subr.bf16.mxu0 0
        %421 = vmatpush1.bf16.msra.mxu0 0
        %422 = vmatprep.subr.bf16.mxu0 0
        %423 = vmatpush1.bf16.msra.mxu0 0
        %424 = vmatprep.subr.bf16.mxu0 0
        %425 = vmatpush1.bf16.msra.mxu0 0
        %426 = vmatprep.subr.bf16.mxu0 0
        %427 = vmatpush1.bf16.msra.mxu0 0
        %428 = vmatprep.subr.bf16.mxu0 0
        %429 = vmatpush1.bf16.msra.mxu0 0
        %430 = vmatprep.subr.bf16.mxu0 0
        %431 = vmatpush1.bf16.msra.mxu0 0
        %432 = vmatprep.mubr.bf16.mxu0 0
        %433 = vmatmul.mubr.bf16.gmra.mrb[0].mxu0 %v377
        %v434 = vpop.f32.mrb[0].mxu0
        %v435 = vadd.f32 0.0, %v434
        %v436 = vpop.f32.mrb[0].mxu0
        %v437 = vpop.f32.mrb[0].mxu0
        %v438 = vadd.f32 0.0, %v437
        %v439 = vpop.f32.mrb[0].mxu0
        %440 = vmatprep.mubr.bf16.mxu0 0
        %441 = vmatmul.mubr.bf16.gmra.mrb[0].mxu0 %v380
        %v442 = vpop.f32.mrb[0].mxu0
        %v443 = vadd.f32 0.0, %v442
        %v444 = vpop.f32.mrb[0].mxu0
        %v445 = vpop.f32.mrb[0].mxu0
        %v446 = vadd.f32 0.0, %v445
        %v447 = vpop.f32.mrb[0].mxu0
        %448 = vmatprep.mubr.bf16.mxu0 0
        %449 = vmatmul.mubr.bf16.gmra.mrb[0].mxu0 %v383
        %v450 = vpop.f32.mrb[0].mxu0
        %v451 = vadd.f32 0.0, %v450
        %v452 = vpop.f32.mrb[0].mxu0
        %v453 = vpop.f32.mrb[0].mxu0
        %v454 = vadd.f32 0.0, %v453
        %v455 = vpop.f32.mrb[0].mxu0
        %456 = vmatprep.mubr.bf16.mxu0 0
        %457 = vmatmul.mubr.bf16.gmra.mrb[0].mxu0 %v386
        %v458 = vpop.f32.mrb[0].mxu0
        %v459 = vadd.f32 0.0, %v458
        %v460 = vpop.f32.mrb[0].mxu0
        %v461 = vpop.f32.mrb[0].mxu0
        %v462 = vadd.f32 0.0, %v461
        %v463 = vpop.f32.mrb[0].mxu0
        %464 = vmatprep.mubr.bf16.mxu0 0
        %465 = vmatmul.mubr.bf16.gmra.mrb[0].mxu0 %v389
        %v466 = vpop.f32.mrb[0].mxu0
        %v467 = vadd.f32 0.0, %v466
        %v468 = vpop.f32.mrb[0].mxu0
        %v469 = vpop.f32.mrb[0].mxu0
        %v470 = vadd.f32 0.0, %v469
        %v471 = vpop.f32.mrb[0].mxu0
        %472 = vmatprep.mubr.bf16.mxu0 0
        %473 = vmatmul.mubr.bf16.gmra.mrb[0].mxu0 %v392
        %v474 = vpop.f32.mrb[0].mxu0
        %v475 = vadd.f32 0.0, %v474
        %v476 = vpop.f32.mrb[0].mxu0
        %v477 = vpop.f32.mrb[0].mxu0
        %v478 = vadd.f32 0.0, %v477
        %v479 = vpop.f32.mrb[0].mxu0
        %480 = vmatprep.mubr.bf16.mxu0 0
        %481 = vmatmul.mubr.bf16.gmra.mrb[0].mxu0 %v395
        %v482 = vpop.f32.mrb[0].mxu0
        %v483 = vadd.f32 0.0, %v482
        %v484 = vpop.f32.mrb[0].mxu0
        %v485 = vpop.f32.mrb[0].mxu0
        %v486 = vadd.f32 0.0, %v485
        %v487 = vpop.f32.mrb[0].mxu0
        %488 = vmatprep.mubr.bf16.mxu0 0
        %489 = vmatmul.mubr.bf16.gmra.mrb[0].mxu0 %v398
        %v490 = vpop.f32.mrb[0].mxu0
        %v491 = vadd.f32 0.0, %v490
        %v492 = vpop.f32.mrb[0].mxu0
        %v493 = vpop.f32.mrb[0].mxu0
        %v494 = vadd.f32 0.0, %v493
        %v495 = vpop.f32.mrb[0].mxu0
        %496 = vdwg.mxu0
        %v497 = vxor.u32 %v435, 2147483648
        %v498 = vxor.u32 %v438, 2147483648
        %v499 = vxor.u32 %v443, 2147483648
        %v500 = vxor.u32 %v446, 2147483648
        %v501 = vxor.u32 %v451, 2147483648
        %v502 = vxor.u32 %v454, 2147483648
        %v503 = vxor.u32 %v459, 2147483648
        %v504 = vxor.u32 %v462, 2147483648
        %v505 = vxor.u32 %v467, 2147483648
        %v506 = vxor.u32 %v470, 2147483648
        %v507 = vxor.u32 %v475, 2147483648
        %v508 = vxor.u32 %v478, 2147483648
        %v509 = vxor.u32 %v483, 2147483648
        %v510 = vxor.u32 %v486, 2147483648
        %v511 = vxor.u32 %v491, 2147483648
        %v512 = vxor.u32 %v494, 2147483648
        %v513 = vmul.f32 %v497, 1.442695
        %v514 = vpow.pop %v513
        %v515 = vmul.f32 %v498, 1.442695
        %v516 = vpow.pop %v515
        %v517 = vmul.f32 %v499, 1.442695
        %v518 = vpow.pop %v517
        %v519 = vmul.f32 %v500, 1.442695
        %v520 = vpow.pop %v519
        %v521 = vmul.f32 %v501, 1.442695
        %v522 = vpow.pop %v521
        %v523 = vmul.f32 %v502, 1.442695
        %v524 = vpow.pop %v523
        %v525 = vmul.f32 %v503, 1.442695
        %v526 = vpow.pop %v525
        %v527 = vmul.f32 %v504, 1.442695
        %v528 = vpow.pop %v527
        %v529 = vmul.f32 %v505, 1.442695
        %v530 = vpow.pop %v529
        %v531 = vmul.f32 %v506, 1.442695
        %v532 = vpow.pop %v531
        %v533 = vmul.f32 %v507, 1.442695
        %v534 = vpow.pop %v533
        %v535 = vmul.f32 %v508, 1.442695
        %v536 = vpow.pop %v535
        %v537 = vmul.f32 %v509, 1.442695
        %v538 = vpow.pop %v537
        %v539 = vmul.f32 %v510, 1.442695
        %v540 = vpow.pop %v539
        %v541 = vmul.f32 %v511, 1.442695
        %v542 = vpow.pop %v541
        %v543 = vmul.f32 %v512, 1.442695
        %v544 = vpow.pop %v543
        %v545 = vadd.f32 %v514, 1.0
        %v546 = vadd.f32 %v516, 1.0
        %v547 = vadd.f32 %v518, 1.0
        %v548 = vadd.f32 %v520, 1.0
        %v549 = vadd.f32 %v522, 1.0
        %v550 = vadd.f32 %v524, 1.0
        %v551 = vadd.f32 %v526, 1.0
        %v552 = vadd.f32 %v528, 1.0
        %v553 = vadd.f32 %v530, 1.0
        %v554 = vadd.f32 %v532, 1.0
        %v555 = vadd.f32 %v534, 1.0
        %v556 = vadd.f32 %v536, 1.0
        %v557 = vadd.f32 %v538, 1.0
        %v558 = vadd.f32 %v540, 1.0
        %v559 = vadd.f32 %v542, 1.0
        %v560 = vadd.f32 %v544, 1.0
        %v561 = vrcp.pop %v545
        %v562 = vmul.f32 1.0, %v561
        %v563 = vrcp.pop %v546
        %v564 = vmul.f32 1.0, %v563
        %v565 = vrcp.pop %v547
        %v566 = vmul.f32 1.0, %v565
        %v567 = vrcp.pop %v548
        %v568 = vmul.f32 1.0, %v567
        %v569 = vrcp.pop %v549
        %v570 = vmul.f32 1.0, %v569
        %v571 = vrcp.pop %v550
        %v572 = vmul.f32 1.0, %v571
        %v573 = vrcp.pop %v551
        %v574 = vmul.f32 1.0, %v573
        %v575 = vrcp.pop %v552
        %v576 = vmul.f32 1.0, %v575
        %v577 = vrcp.pop %v553
        %v578 = vmul.f32 1.0, %v577
        %v579 = vrcp.pop %v554
        %v580 = vmul.f32 1.0, %v579
        %v581 = vrcp.pop %v555
        %v582 = vmul.f32 1.0, %v581
        %v583 = vrcp.pop %v556
        %v584 = vmul.f32 1.0, %v583
        %v585 = vrcp.pop %v557
        %v586 = vmul.f32 1.0, %v585
        %v587 = vrcp.pop %v558
        %v588 = vmul.f32 1.0, %v587
        %v589 = vrcp.pop %v559
        %v590 = vmul.f32 1.0, %v589
        %v591 = vrcp.pop %v560
        %v592 = vmul.f32 1.0, %v591
        %v593 = vmul.f32 %v435, %v562
        %v594 = vmul.f32 %v438, %v564
        %v595 = vmul.f32 %v443, %v566
        %v596 = vmul.f32 %v446, %v568
        %v597 = vmul.f32 %v451, %v570
        %v598 = vmul.f32 %v454, %v572
        %v599 = vmul.f32 %v459, %v574
        %v600 = vmul.f32 %v462, %v576
        %v601 = vmul.f32 %v467, %v578
        %v602 = vmul.f32 %v470, %v580
        %v603 = vmul.f32 %v475, %v582
        %v604 = vmul.f32 %v478, %v584
        %v605 = vmul.f32 %v483, %v586
        %v606 = vmul.f32 %v486, %v588
        %v607 = vmul.f32 %v491, %v590
        %v608 = vmul.f32 %v494, %v592
        %625 = vrot.lane.b32.xlu0 %v435, 64
        %v626 = vpop.permute.xlu0 %625
        %627 = vrot.lane.b32.xlu0 %v438, 64
        %v628 = vpop.permute.xlu0 %627
        %629 = vrot.lane.b32.xlu0 %v443, 64
        %v630 = vpop.permute.xlu0 %629
        %631 = vrot.lane.b32.xlu0 %v446, 64
        %v632 = vpop.permute.xlu0 %631
        %633 = vrot.lane.b32.xlu0 %v451, 64
        %v634 = vpop.permute.xlu0 %633
        %635 = vrot.lane.b32.xlu0 %v454, 64
        %v636 = vpop.permute.xlu0 %635
        %637 = vrot.lane.b32.xlu0 %v459, 64
        %v638 = vpop.permute.xlu0 %637
        %639 = vrot.lane.b32.xlu0 %v462, 64
        %v640 = vpop.permute.xlu0 %639
        %641 = vrot.lane.b32.xlu0 %v467, 64
        %v642 = vpop.permute.xlu0 %641
        %643 = vrot.lane.b32.xlu0 %v470, 64
        %v644 = vpop.permute.xlu0 %643
        %645 = vrot.lane.b32.xlu0 %v475, 64
        %v646 = vpop.permute.xlu0 %645
        %647 = vrot.lane.b32.xlu0 %v478, 64
        %v648 = vpop.permute.xlu0 %647
        %649 = vrot.lane.b32.xlu0 %v483, 64
        %v650 = vpop.permute.xlu0 %649
        %651 = vrot.lane.b32.xlu0 %v486, 64
        %v652 = vpop.permute.xlu0 %651
        %653 = vrot.lane.b32.xlu0 %v491, 64
        %v654 = vpop.permute.xlu0 %653
        %655 = vrot.lane.b32.xlu0 %v494, 64
        %v656 = vpop.permute.xlu0 %655
        %v673 = vmul.f32 %v593, %v626
        %v674 = vmul.f32 %v594, %v628
        %v675 = vmul.f32 %v595, %v630
        %v676 = vmul.f32 %v596, %v632
        %v677 = vmul.f32 %v597, %v634
        %v678 = vmul.f32 %v598, %v636
        %v679 = vmul.f32 %v599, %v638
        %v680 = vmul.f32 %v600, %v640
        %v681 = vmul.f32 %v601, %v642
        %v682 = vmul.f32 %v602, %v644
        %v683 = vmul.f32 %v603, %v646
        %v684 = vmul.f32 %v604, %v648
        %v685 = vmul.f32 %v605, %v650
        %v686 = vmul.f32 %v606, %v652
        %v687 = vmul.f32 %v607, %v654
        %v688 = vmul.f32 %v608, %v656
        %v689 = vpack.c.bf16 %v674, %v673
        %v690 = vpack.c.bf16 %v676, %v675
        %v691 = vpack.c.bf16 %v678, %v677
        %v692 = vpack.c.bf16 %v680, %v679
        %v693 = vpack.c.bf16 %v682, %v681
        %v694 = vpack.c.bf16 %v684, %v683
        %v695 = vpack.c.bf16 %v686, %v685
        %v696 = vpack.c.bf16 %v688, %v687
        %v697 = vld [vmem:[%s266] sm:$0xf]
        %v698 = vld [vmem:[%s266 + $0x4] sm:$0xf]
        %v699 = vld [vmem:[%s266 + $0x8] sm:$0xf]
        %v700 = vld [vmem:[%s266 + $0xc] sm:$0xf]
        %v701 = vld [vmem:[%s266 + $0x10] sm:$0xf]
        %v702 = vld [vmem:[%s266 + $0x14] sm:$0xf]
        %v703 = vld [vmem:[%s266 + $0x18] sm:$0xf]
        %v704 = vld [vmem:[%s266 + $0x1c] sm:$0xf]
        %v713 = vunpack.c.l.b16 %v697
        %v714 = vunpack.c.l.b16 %v698
        %v715 = vunpack.c.l.b16 %v699
        %v716 = vunpack.c.l.b16 %v700
        %v717 = vunpack.c.l.b16 %v701
        %v718 = vunpack.c.l.b16 %v702
        %v719 = vunpack.c.l.b16 %v703
        %v720 = vunpack.c.l.b16 %v704
        %v721 = vpack.c.b16 %v714, %v713
        %v722 = vpack.c.b16 %v716, %v715
        %v723 = vpack.c.b16 %v718, %v717
        %v724 = vpack.c.b16 %v720, %v719
        %vm729 = vcmask 523264
        %v731 = vsel %vm729, %v689, 0
        %v734 = vsel %vm729, %v690, 0
        %v737 = vsel %vm729, %v691, 0
        %v740 = vsel %vm729, %v692, 0
        %v743 = vsel %vm729, %v693, 0
        %v746 = vsel %vm729, %v694, 0
        %v749 = vsel %vm729, %v695, 0
        %v752 = vsel %vm729, %v696, 0
        %754 = vmatprep.subr.bf16.mxu0 0
        %755 = vmatpush1.bf16.msra.mxu0 %v721
        %756 = vmatprep.subr.bf16.mxu0 0
        %757 = vmatpush1.bf16.msra.mxu0 %v722
        %758 = vmatprep.subr.bf16.mxu0 0
        %759 = vmatpush1.bf16.msra.mxu0 %v723
        %760 = vmatprep.subr.bf16.mxu0 0
        %761 = vmatpush1.bf16.msra.mxu0 %v724
        %762 = vmatprep.subr.bf16.mxu0 0
        %763 = vmatpush1.bf16.msra.mxu0 0
        %764 = vmatprep.subr.bf16.mxu0 0
        %765 = vmatpush1.bf16.msra.mxu0 0
        %766 = vmatprep.subr.bf16.mxu0 0
        %767 = vmatpush1.bf16.msra.mxu0 0
        %768 = vmatprep.subr.bf16.mxu0 0
        %769 = vmatpush1.bf16.msra.mxu0 0
        %770 = vmatprep.subr.bf16.mxu0 0
        %771 = vmatpush1.bf16.msra.mxu0 0
        %772 = vmatprep.subr.bf16.mxu0 0
        %773 = vmatpush1.bf16.msra.mxu0 0
        %774 = vmatprep.subr.bf16.mxu0 0
        %775 = vmatpush1.bf16.msra.mxu0 0
        %776 = vmatprep.subr.bf16.mxu0 0
        %777 = vmatpush1.bf16.msra.mxu0 0
        %778 = vmatprep.subr.bf16.mxu0 0
        %779 = vmatpush1.bf16.msra.mxu0 0
        %780 = vmatprep.subr.bf16.mxu0 0
        %781 = vmatpush1.bf16.msra.mxu0 0
        %782 = vmatprep.subr.bf16.mxu0 0
        %783 = vmatpush1.bf16.msra.mxu0 0
        %784 = vmatprep.subr.bf16.mxu0 0
        %785 = vmatpush1.bf16.msra.mxu0 0
        %786 = vmatprep.mubr.bf16.mxu0 0
        %787 = vmatmul.mubr.bf16.gmra.mrb[0].mxu0 %v731
        %v788 = vpop.f32.mrb[0].mxu0
        %v789 = vadd.f32 0.0, %v788
        %v790 = vpop.f32.mrb[0].mxu0
        %v791 = vpop.f32.mrb[0].mxu0
        %v792 = vadd.f32 0.0, %v791
        %v793 = vpop.f32.mrb[0].mxu0
        %794 = vmatprep.mubr.bf16.mxu0 0
        %795 = vmatmul.mubr.bf16.gmra.mrb[0].mxu0 %v734
        %v796 = vpop.f32.mrb[0].mxu0
        %v797 = vadd.f32 0.0, %v796
        %v798 = vpop.f32.mrb[0].mxu0
        %v799 = vpop.f32.mrb[0].mxu0
        %v800 = vadd.f32 0.0, %v799
        %v801 = vpop.f32.mrb[0].mxu0
        %802 = vmatprep.mubr.bf16.mxu0 0
        %803 = vmatmul.mubr.bf16.gmra.mrb[0].mxu0 %v737
        %v804 = vpop.f32.mrb[0].mxu0
        %v805 = vadd.f32 0.0, %v804
        %v806 = vpop.f32.mrb[0].mxu0
        %v807 = vpop.f32.mrb[0].mxu0
        %v808 = vadd.f32 0.0, %v807
        %v809 = vpop.f32.mrb[0].mxu0
        %810 = vmatprep.mubr.bf16.mxu0 0
        %811 = vmatmul.mubr.bf16.gmra.mrb[0].mxu0 %v740
        %v812 = vpop.f32.mrb[0].mxu0
        %v813 = vadd.f32 0.0, %v812
        %v814 = vpop.f32.mrb[0].mxu0
        %v815 = vpop.f32.mrb[0].mxu0
        %v816 = vadd.f32 0.0, %v815
        %v817 = vpop.f32.mrb[0].mxu0
        %818 = vmatprep.mubr.bf16.mxu0 0
        %819 = vmatmul.mubr.bf16.gmra.mrb[0].mxu0 %v743
        %v820 = vpop.f32.mrb[0].mxu0
        %v821 = vadd.f32 0.0, %v820
        %v822 = vpop.f32.mrb[0].mxu0
        %v823 = vpop.f32.mrb[0].mxu0
        %v824 = vadd.f32 0.0, %v823
        %v825 = vpop.f32.mrb[0].mxu0
        %826 = vmatprep.mubr.bf16.mxu0 0
        %827 = vmatmul.mubr.bf16.gmra.mrb[0].mxu0 %v746
        %v828 = vpop.f32.mrb[0].mxu0
        %v829 = vadd.f32 0.0, %v828
        %v830 = vpop.f32.mrb[0].mxu0
        %v831 = vpop.f32.mrb[0].mxu0
        %v832 = vadd.f32 0.0, %v831
        %v833 = vpop.f32.mrb[0].mxu0
        %834 = vmatprep.mubr.bf16.mxu0 0
        %835 = vmatmul.mubr.bf16.gmra.mrb[0].mxu0 %v749
        %v836 = vpop.f32.mrb[0].mxu0
        %v837 = vadd.f32 0.0, %v836
        %v838 = vpop.f32.mrb[0].mxu0
        %v839 = vpop.f32.mrb[0].mxu0
        %v840 = vadd.f32 0.0, %v839
        %v841 = vpop.f32.mrb[0].mxu0
        %842 = vmatprep.mubr.bf16.mxu0 0
        %843 = vmatmul.mubr.bf16.gmra.mrb[0].mxu0 %v752
        %v844 = vpop.f32.mrb[0].mxu0
        %v845 = vadd.f32 0.0, %v844
        %v846 = vpop.f32.mrb[0].mxu0
        %v847 = vpop.f32.mrb[0].mxu0
        %v848 = vadd.f32 0.0, %v847
        %v849 = vpop.f32.mrb[0].mxu0
        %850 = vdwg.mxu0
        %p851 = scmp.eq.s32.totalorder %s30, 0
        // Predicated region
        $region45: #{switch_moe_forward.1} parent=31 // pred_check
          %p852 = pneg %p851
        $region46: #{switch_moe_forward.1} parent=31 // pred_check_branch
          %854 = sbr.rel (%p852) target = $region48
        $region47: #{switch_moe_forward.1} parent=31 // pred_region
          %855 = vst.msk [vmem:[#allocation2] sm:$0xff] %vm375, %v789
          %856 = vst.msk [vmem:[#allocation2 + $0x8] sm:$0xff] %vm375, %v792
          %857 = vst.msk [vmem:[#allocation2 + $0x10] sm:$0xff] %vm375, %v797
          %858 = vst.msk [vmem:[#allocation2 + $0x18] sm:$0xff] %vm375, %v800
          %859 = vst.msk [vmem:[#allocation2 + $0x20] sm:$0xff] %vm375, %v805
          %860 = vst.msk [vmem:[#allocation2 + $0x28] sm:$0xff] %vm375, %v808
          %861 = vst.msk [vmem:[#allocation2 + $0x30] sm:$0xff] %vm375, %v813
          %862 = vst.msk [vmem:[#allocation2 + $0x38] sm:$0xff] %vm375, %v816
          %863 = vst.msk [vmem:[#allocation2 + $0x40] sm:$0xff] %vm375, %v821
          %864 = vst.msk [vmem:[#allocation2 + $0x48] sm:$0xff] %vm375, %v824
          %865 = vst.msk [vmem:[#allocation2 + $0x50] sm:$0xff] %vm375, %v829
          %866 = vst.msk [vmem:[#allocation2 + $0x58] sm:$0xff] %vm375, %v832
          %867 = vst.msk [vmem:[#allocation2 + $0x60] sm:$0xff] %vm375, %v837
          %868 = vst.msk [vmem:[#allocation2 + $0x68] sm:$0xff] %vm375, %v840
          %869 = vst.msk [vmem:[#allocation2 + $0x70] sm:$0xff] %vm375, %v845
          %870 = vst.msk [vmem:[#allocation2 + $0x78] sm:$0xff] %vm375, %v848
        $region48: #{switch_moe_forward.1} parent=31 // pred_fallthru
          _
        %p871 = scmp.gt.s32.totalorder %s30, 0
        // Predicated region
        $region49: #{switch_moe_forward.1} parent=31 // pred_check
          %p872 = pneg %p871
        $region50: #{switch_moe_forward.1} parent=31 // pred_check_branch
          %874 = sbr.rel (%p872) target = $region52
        $region51: #{switch_moe_forward.1} parent=31 // pred_region
          %v875 = vld [vmem:[#allocation2] sm:$0xff]
          %v876 = vld [vmem:[#allocation2 + $0x8] sm:$0xff]
          %v877 = vld [vmem:[#allocation2 + $0x10] sm:$0xff]
          %v878 = vld [vmem:[#allocation2 + $0x18] sm:$0xff]
          %v879 = vld [vmem:[#allocation2 + $0x20] sm:$0xff]
          %v880 = vld [vmem:[#allocation2 + $0x28] sm:$0xff]
          %v881 = vld [vmem:[#allocation2 + $0x30] sm:$0xff]
          %v882 = vld [vmem:[#allocation2 + $0x38] sm:$0xff]
          %v883 = vld [vmem:[#allocation2 + $0x40] sm:$0xff]
          %v884 = vld [vmem:[#allocation2 + $0x48] sm:$0xff]
          %v885 = vld [vmem:[#allocation2 + $0x50] sm:$0xff]
          %v886 = vld [vmem:[#allocation2 + $0x58] sm:$0xff]
          %v887 = vld [vmem:[#allocation2 + $0x60] sm:$0xff]
          %v888 = vld [vmem:[#allocation2 + $0x68] sm:$0xff]
          %v889 = vld [vmem:[#allocation2 + $0x70] sm:$0xff]
          %v890 = vld [vmem:[#allocation2 + $0x78] sm:$0xff]
          %v891 = vadd.f32 %v875, %v789
          %v892 = vadd.f32 %v876, %v792
          %v893 = vadd.f32 %v877, %v797
          %v894 = vadd.f32 %v878, %v800
          %v895 = vadd.f32 %v879, %v805
          %v896 = vadd.f32 %v880, %v808
          %v897 = vadd.f32 %v881, %v813
          %v898 = vadd.f32 %v882, %v816
          %v899 = vadd.f32 %v883, %v821
          %v900 = vadd.f32 %v884, %v824
          %v901 = vadd.f32 %v885, %v829
          %v902 = vadd.f32 %v886, %v832
          %v903 = vadd.f32 %v887, %v837
          %v904 = vadd.f32 %v888, %v840
          %v905 = vadd.f32 %v889, %v845
          %v906 = vadd.f32 %v890, %v848
          %907 = vst.msk [vmem:[#allocation2] sm:$0xff] %vm375, %v891
          %908 = vst.msk [vmem:[#allocation2 + $0x8] sm:$0xff] %vm375, %v892
          %909 = vst.msk [vmem:[#allocation2 + $0x10] sm:$0xff] %vm375, %v893
          %910 = vst.msk [vmem:[#allocation2 + $0x18] sm:$0xff] %vm375, %v894
          %911 = vst.msk [vmem:[#allocation2 + $0x20] sm:$0xff] %vm375, %v895
          %912 = vst.msk [vmem:[#allocation2 + $0x28] sm:$0xff] %vm375, %v896
          %913 = vst.msk [vmem:[#allocation2 + $0x30] sm:$0xff] %vm375, %v897
          %914 = vst.msk [vmem:[#allocation2 + $0x38] sm:$0xff] %vm375, %v898
          %915 = vst.msk [vmem:[#allocation2 + $0x40] sm:$0xff] %vm375, %v899
          %916 = vst.msk [vmem:[#allocation2 + $0x48] sm:$0xff] %vm375, %v900
          %917 = vst.msk [vmem:[#allocation2 + $0x50] sm:$0xff] %vm375, %v901
          %918 = vst.msk [vmem:[#allocation2 + $0x58] sm:$0xff] %vm375, %v902
          %919 = vst.msk [vmem:[#allocation2 + $0x60] sm:$0xff] %vm375, %v903
          %920 = vst.msk [vmem:[#allocation2 + $0x68] sm:$0xff] %vm375, %v904
          %921 = vst.msk [vmem:[#allocation2 + $0x70] sm:$0xff] %vm375, %v905
          %922 = vst.msk [vmem:[#allocation2 + $0x78] sm:$0xff] %vm375, %v906
        $region52: #{switch_moe_forward.1} parent=31 // pred_fallthru
          _
        // Predicated region
        $region53: #{switch_moe_forward.1} parent=31 // pred_check
          %p923 = pneg %p851
        $region54: #{switch_moe_forward.1} parent=31 // pred_check_branch
          %925 = sbr.rel (%p923) target = $region56
        $region55: #{switch_moe_forward.1} parent=31 // pred_region
          %v926 = vld [vmem:[#allocation2] sm:$0xff]
          %v927 = vld [vmem:[#allocation2 + $0x8] sm:$0xff]
          %v928 = vld [vmem:[#allocation2 + $0x10] sm:$0xff]
          %v929 = vld [vmem:[#allocation2 + $0x18] sm:$0xff]
          %v930 = vld [vmem:[#allocation2 + $0x20] sm:$0xff]
          %v931 = vld [vmem:[#allocation2 + $0x28] sm:$0xff]
          %v932 = vld [vmem:[#allocation2 + $0x30] sm:$0xff]
          %v933 = vld [vmem:[#allocation2 + $0x38] sm:$0xff]
          %v934 = vld [vmem:[#allocation2 + $0x40] sm:$0xff]
          %v935 = vld [vmem:[#allocation2 + $0x48] sm:$0xff]
          %v936 = vld [vmem:[#allocation2 + $0x50] sm:$0xff]
          %v937 = vld [vmem:[#allocation2 + $0x58] sm:$0xff]
          %v938 = vld [vmem:[#allocation2 + $0x60] sm:$0xff]
          %v939 = vld [vmem:[#allocation2 + $0x68] sm:$0xff]
          %v940 = vld [vmem:[#allocation2 + $0x70] sm:$0xff]
          %v941 = vld [vmem:[#allocation2 + $0x78] sm:$0xff]
          %v942 = vpack.c.bf16 %v927, %v926
          %v943 = vpack.c.bf16 %v929, %v928
          %v944 = vpack.c.bf16 %v931, %v930
          %v945 = vpack.c.bf16 %v933, %v932
          %v946 = vpack.c.bf16 %v935, %v934
          %v947 = vpack.c.bf16 %v937, %v936
          %v948 = vpack.c.bf16 %v939, %v938
          %v949 = vpack.c.bf16 %v941, %v940
          %v958 = vunpack.c.l.b16 %v942
          %v959 = vunpack.c.h.b16 %v942
          %v960 = vunpack.c.l.b16 %v943
          %v961 = vunpack.c.h.b16 %v943
          %v962 = vunpack.c.l.b16 %v944
          %v963 = vunpack.c.h.b16 %v944
          %v964 = vunpack.c.l.b16 %v945
          %v965 = vunpack.c.h.b16 %v945
          %v966 = vunpack.c.l.b16 %v946
          %v967 = vunpack.c.h.b16 %v946
          %v968 = vunpack.c.l.b16 %v947
          %v969 = vunpack.c.h.b16 %v947
          %v970 = vunpack.c.l.b16 %v948
          %v971 = vunpack.c.h.b16 %v948
          %v972 = vunpack.c.l.b16 %v949
          %v973 = vunpack.c.h.b16 %v949
          %v974 = vpack.c.b16 %v958, %v958
          %v975 = vpack.c.b16 %v959, %v959
          %v976 = vpack.c.b16 %v960, %v960
          %v977 = vpack.c.b16 %v961, %v961
          %v978 = vpack.c.b16 %v962, %v962
          %v979 = vpack.c.b16 %v963, %v963
          %v980 = vpack.c.b16 %v964, %v964
          %v981 = vpack.c.b16 %v965, %v965
          %v982 = vpack.c.b16 %v966, %v966
          %v983 = vpack.c.b16 %v967, %v967
          %v984 = vpack.c.b16 %v968, %v968
          %v985 = vpack.c.b16 %v969, %v969
          %v986 = vpack.c.b16 %v970, %v970
          %v987 = vpack.c.b16 %v971, %v971
          %v988 = vpack.c.b16 %v972, %v972
          %v989 = vpack.c.b16 %v973, %v973
          %vm1006 = vcmask 257024
          %1007 = vst.msk [vmem:[%s298] sm:$0xf] %vm1006, %v974
          %1008 = vst.msk [vmem:[%s298 + $0x4] sm:$0xf] %vm1006, %v975
          %1009 = vst.msk [vmem:[%s298 + $0x8] sm:$0xf] %vm1006, %v976
          %1010 = vst.msk [vmem:[%s298 + $0xc] sm:$0xf] %vm1006, %v977
          %1011 = vst.msk [vmem:[%s298 + $0x10] sm:$0xf] %vm1006, %v978
          %1012 = vst.msk [vmem:[%s298 + $0x14] sm:$0xf] %vm1006, %v979
          %1013 = vst.msk [vmem:[%s298 + $0x18] sm:$0xf] %vm1006, %v980
          %1014 = vst.msk [vmem:[%s298 + $0x1c] sm:$0xf] %vm1006, %v981
          %1015 = vst.msk [vmem:[%s298 + $0x20] sm:$0xf] %vm1006, %v982
          %1016 = vst.msk [vmem:[%s298 + $0x24] sm:$0xf] %vm1006, %v983
          %1017 = vst.msk [vmem:[%s298 + $0x28] sm:$0xf] %vm1006, %v984
          %1018 = vst.msk [vmem:[%s298 + $0x2c] sm:$0xf] %vm1006, %v985
          %1019 = vst.msk [vmem:[%s298 + $0x30] sm:$0xf] %vm1006, %v986
          %1020 = vst.msk [vmem:[%s298 + $0x34] sm:$0xf] %vm1006, %v987
          %1021 = vst.msk [vmem:[%s298 + $0x38] sm:$0xf] %vm1006, %v988
          %1022 = vst.msk [vmem:[%s298 + $0x3c] sm:$0xf] %vm1006, %v989
        $region56: #{switch_moe_forward.1} parent=31 // pred_fallthru
          _
        %s1023 = sand.u32 %s136, 1
        %s1024 = scalar_lea.sflag [#allocation5], %s1023
        %s1025 = sand.u32 %s136, 1
        %s1026 = smul.addr %s1025, 64
        %s1027 = scalar_lea.vmem [#allocation9], %s1026
        // Predicated region
        $region57: #{switch_moe_forward.1} parent=31 // pred_check
          %p1028 = pneg %p146
        $region58: #{switch_moe_forward.1} parent=31 // pred_check_branch
          %1030 = sbr.rel (%p1028) target = $region60
        $region59: #{switch_moe_forward.1} parent=31 // pred_region
          %s1031 = smul.u32 16, %s29
          %s1033 = ssub.s32 1024, 1024
          %1034 = vsyncadd %s1024, %s1033
          %s1035 = smul.addr %s28, 16
          %s1036 = sadd.s32 %s1031, %s1035
          %s1037 = smul.addr %s1036, 64
          %s1038 = scalar_lea.hbm %s3, %s1037
          %s1039 = sshll.u32 %s1027, 4
          %s1040 = int_to_ptr.vmem [resolvable:$true] %s1039
          %1045 = dma.vmem_to_hbm [thread:$0]  %s1040, 1024, %s1038, %s1024, 64, 64, 4
        $region60: #{switch_moe_forward.1} parent=31 // pred_fallthru
          _
      $region32: #{switch_moe_forward.1} parent=5 // pred_fallthru
        _
      %p1046 = scmp.le.s32.totalorder 2, %s18
      // Predicated region
      $region61: #{switch_moe_forward.1} parent=5 // pred_check
        %p1047 = pneg %p1046
      $region62: #{switch_moe_forward.1} parent=5 // pred_check_branch
        %1049 = sbr.rel (%p1047) target = $region64
      $region63: #{switch_moe_forward.1} parent=5 // pred_region
        %s1050 = ssub.s32 %s18, 2
        // Predicated region
        $region65: #{switch_moe_forward.1} parent=63 // pred_check
          %p1051 = pneg %p152
        $region66: #{switch_moe_forward.1} parent=63 // pred_check_branch
          %1053 = sbr.rel (%p1051) target = $region68
        $region67: #{switch_moe_forward.1} parent=63 // pred_region
          %s1054 = sand.u32 %s137, 1
          %s1055 = scalar_lea.sflag [#allocation5], %s1054
          %s1056 = sand.u32 %s137, 1
          %s1057 = smul.addr %s1056, 64
          %s1058 = scalar_lea.vmem [#allocation9], %s1057
          %1059 = dma.done %s1055, 1024
        $region68: #{switch_moe_forward.1} parent=63 // pred_fallthru
          _
      $region64: #{switch_moe_forward.1} parent=5 // pred_fallthru
        _
    $region6: #{switch_moe_forward.1} parent=1 // loop_footer
      %s22 = sadd.s32 1, %s18
    $region7: #{switch_moe_forward.1} parent=1 // loop_footer_branch
      %17 = sbr.rel target = $region3
    $region8: #{switch_moe_forward.1} parent=1 // loop_exit
      _
    %1060 = vsyncpa [#allocation4], 1
    %s1061 = scalar_lea.sflag [#allocation4], 1
    %1062 = vsyncpa %s1061, 1
    %1063 = vsyncpa [#allocation7], 1
    %s1064 = scalar_lea.sflag [#allocation7], 1
    %1065 = vsyncpa %s1064, 1
    %1066 = vsyncpa [#allocation5], 1
    %s1067 = scalar_lea.sflag [#allocation5], 1
    %1068 = vsyncpa %s1067, 1

</llo_original>
